<compile_context>
chip_gen: v7x
topology: tpu7x:2x2x1
jax: 0.10.0
libtpu: 0.0.40
codegen_flags: <defaults>
</compile_context>

<pallas_src>
import math
import functools

import jax
import jax.numpy as jnp
from jax.experimental import pallas as pl
from jax.experimental.pallas import tpu as pltpu

# ----------------------------- static action config -----------------------------
N_T = 10          # number of time slices of the path (x holds the N_T-2 interior points)
DT = 0.1          # time step of the action discretization
OMEGA = 1.0       # harmonic-oscillator frequency (V(x) = 0.5 * omega^2 * x^2)


# ----------------------------- small helpers -----------------------------
def _round_up(v: int, m: int) -> int:
    return ((v + m - 1) // m) * m


def _sublane(itemsize: int) -> int:
    # Sublane packing: 8 rows for 4-byte, 16 for 2-byte, 32 for 1-byte dtypes.
    return max(8, 32 // max(1, itemsize))


def _device_kind() -> str:
    try:
        return jax.devices()[0].device_kind.lower()
    except Exception:
        return ""


def _num_tensorcores() -> int:
    # Best-effort TensorCore count; defaults to 1 (always correct).
    try:
        nc = int(getattr(jax.devices()[0], "num_cores", 1) or 1)
    except Exception:
        nc = 1
    return max(1, min(nc, 2))


def _vmem_plan(kind: str):
    """Return (per z-input per-buffer tile bytes, vmem_limit cap) per generation."""
    if "v7" in kind:          # v7x: 64 MiB physical VMEM per TC -> stay well under
        return 4 << 20, 48 << 20
    if "v6" in kind:          # v6e: 128 MiB VMEM, ~1.4 TB/s HBM -> bigger tiles
        return 8 << 20, 96 << 20
    if "v5" in kind:          # v5e: 16 MiB scoped default, 128 MiB physical
        return 4 << 20, 64 << 20
    return 4 << 20, 48 << 20  # unknown: conservative and v7x-safe


# ----------------------------- kernel -----------------------------
def _loss_kernel(z_in_ref, z_out_ref, x_ref, recon_ref, action_ref, *,
                 m: int, dt: float, omega: float):
    """One (core, tile) step: accumulate (8,128) partial sums for recon & action."""
    step = pl.program_id(1)

    @pl.when(step == 0)
    def _():
        recon_ref[...] = jnp.zeros_like(recon_ref)
        action_ref[...] = jnp.zeros_like(action_ref)

    # ---------------- reconstruction partial: sum of squared error ----------------
    # (padded lanes hold 0 in both slabs -> diff = 0 -> contribute nothing)
    z_in = z_in_ref[...].astype(jnp.float32)        # (TZ, 128)
    z_out = z_out_ref[...].astype(jnp.float32)      # (TZ, 128)
    d = (z_in - z_out).reshape(-1, 8, 128)          # regroup into vreg tiles (free)
    recon_ref[...] += jnp.sum(d * d, axis=0)        # VPU adds across vregs -> (8,128)

    # ---------------- action partial (simplified harmonic-oscillator form) --------
    # x is packed 128/m samples per lane-row, sample starts are m-lane aligned,
    # so roll(+1) followed by masking lane % m == 0 reproduces x_{j-1} with the
    # first interior point's predecessor forced to 0 (the fixed endpoint).
    x = x_ref[...].astype(jnp.float32)              # (TX, 128)
    lane = jax.lax.broadcasted_iota(jnp.int32, x.shape, 1)
    x_prev = pltpu.roll(x, shift=1, axis=1)         # XLU (free slot)
    x_prev = jnp.where(lane % m == 0, jnp.zeros_like(x_prev), x_prev)
    c_diag = 1.0 / dt + 0.5 * dt * omega * omega
    act = c_diag * (x * x) - (1.0 / dt) * (x * x_prev)
    action_ref[...] += jnp.sum(act.reshape(-1, 8, 128), axis=0)


# ----------------------------- wrapper -----------------------------
def _pack_lane_dense(a: jax.Array, rows: int) -> jax.Array:
    """Flatten row-major and zero-pad to a lane-dense (rows, 128) slab."""
    flat = a.reshape(-1)
    pad = rows * 128 - flat.shape[0]
    if pad:
        flat = jnp.pad(flat, (0, pad))
    return flat.reshape(rows, 128)


def loss_func_forward(z_in: jax.Array, z_out: jax.Array, x: jax.Array,
                      params=None, *, tile_z_rows: int | None = None,
                      num_cores: int | None = None):
    """Pallas implementation of LossFunc.forward (concrete parts)."""
    B, D = z_in.shape
    assert z_out.shape == (B, D), "z_in and z_out must have the same shape"
    assert z_out.dtype == z_in.dtype, "z_in and z_out must share a dtype"
    Bx, M = x.shape
    assert Bx == B, "z_in and x must share the batch dimension"
    assert M == N_T - 2, "x must have shape (batch, N_T - 2)"
    assert 128 % M == 0, "lane-dense x packing requires (N_T-2) to divide 128"

    z_item = jnp.dtype(z_in.dtype).itemsize
    x_item = jnp.dtype(x.dtype).itemsize
    sub_z = _sublane(z_item)
    sub_x = _sublane(x_item)

    kind = _device_kind()
    per_buf_budget, vmem_cap = _vmem_plan(kind)

    # Lane-dense row counts (before padding).
    r_z = pl.cdiv(B * D, 128)
    r_x = pl.cdiv(B * M, 128)

    # ---- choose the z tile (streaming unit) ----
    data_rows = _round_up(r_z, sub_z)
    if tile_z_rows is None:
        budget_rows = max(sub_z, ((per_buf_budget // (128 * z_item)) // sub_z) * sub_z)
        tz = min(budget_rows, data_rows)
    else:
        tz = _round_up(max(int(tile_z_rows), sub_z), sub_z)

    num_inner = pl.cdiv(r_z, tz)
    if num_cores is None:
        num_cores = _num_tensorcores()
    num_cores = max(1, int(num_cores))
    if num_inner < 2:
        num_cores = 1                      # no point splitting a single tile
    tiles_per_core = pl.cdiv(num_inner, num_cores)
    total_tiles = num_cores * tiles_per_core

    z_rows = total_tiles * tz
    tx = _round_up(max(pl.cdiv(r_x, total_tiles), 1), sub_x)
    x_rows = total_tiles * tx

    # ---- layout plumbing (wrapper side): zero-padded lane-dense slabs ----
    z_in_p = _pack_lane_dense(z_in, z_rows)
    z_out_p = _pack_lane_dense(z_out, z_rows)
    x_p = _pack_lane_dense(x, x_rows)

    # ---- honest VMEM budget: double-buffered inputs + f32 intermediates ----
    vmem_needed = (2 * 2 * tz * 128 * z_item     # z_in + z_out, 2 pipeline buffers each
                   + 2 * tx * 128 * x_item       # x, 2 pipeline buffers
                   + 2 * tz * 128 * 4            # f32 intermediates headroom
                   + 4 * 8 * 128 * 4             # (8,128) partial output blocks
                   + (2 << 20))                  # slack
    vmem_limit = int(min(vmem_cap, max(32 << 20, vmem_needed)))

    kernel = functools.partial(_loss_kernel, m=M, dt=DT, omega=OMEGA)

    cost = pl.CostEstimate(
        flops=3 * B * D + 8 * B * M + 64,
        transcendentals=0,
        bytes_accessed=(2 * z_rows * 128 * z_item + x_rows * 128 * x_item
                        + 2 * num_cores * 8 * 128 * 4),
    )

    z_spec = pl.BlockSpec((tz, 128), lambda c, i: (c * tiles_per_core + i, 0))
    x_spec = pl.BlockSpec((tx, 128), lambda c, i: (c * tiles_per_core + i, 0))
    part_spec = pl.BlockSpec((8, 128), lambda c, i: (c, 0))   # per-core partial block
    part_shape = jax.ShapeDtypeStruct((num_cores * 8, 128), jnp.float32)

    recon_parts, action_parts = pl.pallas_call(
        kernel,
        out_shape=(part_shape, part_shape),
        grid=(num_cores, tiles_per_core),
        in_specs=[z_spec, z_spec, x_spec],
        out_specs=(part_spec, part_spec),
        compiler_params=pltpu.CompilerParams(
            dimension_semantics=("parallel", "arbitrary"),
            vmem_limit_bytes=vmem_limit,
        ),
        cost_estimate=cost,
    )(z_in_p, z_out_p, x_p)

    # Final cross-lane reduction + scaling on tiny (num_cores*8, 128) partials.
    inv_b = 1.0 / B
    recon_loss = 0.5 * jnp.sum(recon_parts) * inv_b
    norm_part = 0.5 * (N_T - 1) * math.log(2.0 * math.pi * DT)
    action_loss = norm_part + jnp.sum(action_parts) * inv_b
    # trial_distribution_loss and offset are abstract in the reference -> contribute 0.
    loss = action_loss + recon_loss
    loss_dict = {
        "action_loss": action_loss,
        "reconstruction_loss": recon_loss,
        "trial_distribution_loss": None,   # abstract in reference module
        "offset": None,                    # abstract in reference module
    }
    return loss, loss_dict


# ----------------------------- pure-JAX reference -----------------------------
def _reference(z_in, z_out, x):
    z_in = z_in.astype(jnp.float32)
    z_out = z_out.astype(jnp.float32)
    x = x.astype(jnp.float32)
    recon = 0.5 * jnp.mean(jnp.sum((z_in - z_out) ** 2, axis=-1))
    zeros = jnp.zeros((x.shape[0], 1), x.dtype)
    x_full = jnp.concatenate([zeros, x, zeros], axis=-1)
    d = x_full[:, 1:] - x_full[:, :-1]
    kinetic = jnp.sum(d * d, axis=-1) / (2.0 * DT)
    potential = DT * 0.5 * (OMEGA ** 2) * jnp.sum(x * x, axis=-1)
    action = kinetic + potential
    norm_part = 0.5 * (N_T - 1) * math.log(2.0 * math.pi * DT)
    action_loss = norm_part + jnp.mean(action)
    return action_loss + recon


if __name__ == "__main__":
    key = jax.random.PRNGKey(0)
    ks = jax.random.split(key, 9)

    # ---- Case 1: tiny demo shapes (single-tile path), f32, auto plan ----
    B, D = 2, 32
    z_in = jax.random.normal(ks[0], (B, D), dtype=jnp.float32)
    z_out = jax.random.normal(ks[1], (B, D), dtype=jnp.float32)
    x = jax.random.normal(ks[2], (B, N_T - 2), dtype=jnp.float32)
    loss, loss_dict = loss_func_forward(z_in, z_out, x)
    jax.block_until_ready(loss)
    ref = _reference(z_in, z_out, x)
    assert jnp.allclose(loss, ref, rtol=1e-5, atol=1e-5), (loss, ref)

    # ---- Case 2: ragged sizes, forced tiny tiles + forced 2-way core split ----
    # Exercises multi-tile accumulation, the parallel leading axis and the
    # zero-padded slabs.  Correct on single-TC chips too (the parallel axis
    # just runs serially and each c re-initializes its own partial block).
    B2, D2 = 50, 40
    z_in2 = jax.random.normal(ks[3], (B2, D2), dtype=jnp.float32)
    z_out2 = jax.random.normal(ks[4], (B2, D2), dtype=jnp.float32)
    x2 = jax.random.normal(ks[5], (B2, N_T - 2), dtype=jnp.float32)
    loss2, _ = loss_func_forward(z_in2, z_out2, x2, tile_z_rows=8, num_cores=2)
    jax.block_until_ready(loss2)
    ref2 = _reference(z_in2, z_out2, x2)
    assert jnp.allclose(loss2, ref2, rtol=1e-5, atol=1e-5), (loss2, ref2)

    # ---- Case 3: bf16 inputs (16-row sublane alignment, in-kernel upcast) ----
    B3, D3 = 16, 96
    z_in3 = jax.random.normal(ks[6], (B3, D3), dtype=jnp.bfloat16)
    z_out3 = jax.random.normal(ks[7], (B3, D3), dtype=jnp.bfloat16)
    x3 = jax.random.normal(ks[8], (B3, N_T - 2), dtype=jnp.bfloat16)
    loss3, _ = loss_func_forward(z_in3, z_out3, x3)
    jax.block_until_ready(loss3)
    ref3 = _reference(z_in3, z_out3, x3)
    assert jnp.allclose(loss3, ref3, rtol=1e-4, atol=1e-4), (loss3, ref3)

    print("KERNEL_OK")
</pallas_src>

<mosaic_0001>
module attributes {stable_mosaic.version = 11 : i64} {
  func.func @_loss_kernel(%arg0: i32, %arg1: i32, %arg2: memref<8x128xf32, #tpu.memory_space<vmem>>, %arg3: memref<8x128xf32, #tpu.memory_space<vmem>>, %arg4: memref<8x128xf32, #tpu.memory_space<vmem>>, %arg5: memref<8x128xf32, #tpu.memory_space<vmem>>, %arg6: memref<8x128xf32, #tpu.memory_space<vmem>>) attributes {dimension_semantics = [#tpu.dimension_semantics<parallel>, #tpu.dimension_semantics<arbitrary>], iteration_bounds = array<i64: 1, 1>, scalar_prefetch = 0 : i64, scratch_operands = 0 : i64, tpu.core_type = #tpu.core_type<tc>, window_params = [{transform_indices = @transform_0, window_bounds = array<i64: 8, 128>}, {transform_indices = @transform_1, window_bounds = array<i64: 8, 128>}, {transform_indices = @transform_2, window_bounds = array<i64: 8, 128>}, {transform_indices = @transform_3, window_bounds = array<i64: 8, 128>}, {transform_indices = @transform_4, window_bounds = array<i64: 8, 128>}]} {
    %c0_i32 = arith.constant 0 : i32
    %0 = arith.cmpi eq, %arg1, %c0_i32 : i32
    %1 = arith.extui %0 : i1 to i32
    %c0_i32_0 = arith.constant 0 : i32
    %2 = arith.cmpi ne, %1, %c0_i32_0 : i32
    scf.if %2 {
      %cst_24 = arith.constant 0.000000e+00 : f32
      %47 = vector.broadcast %cst_24 : f32 to vector<8x128xf32>
      %c0_25 = arith.constant 0 : index
      %c0_26 = arith.constant 0 : index
      %48 = vector.load %arg5[%c0_25, %c0_26] : memref<8x128xf32, #tpu.memory_space<vmem>>, vector<8x128xf32>
      tpu.vector_store %arg5[%c0_25, %c0_26], %47 {strides = array<i32>} : memref<8x128xf32, #tpu.memory_space<vmem>>, vector<8x128xf32>,
      %cst_27 = arith.constant 0.000000e+00 : f32
      %49 = vector.broadcast %cst_27 : f32 to vector<8x128xf32>
      %c0_28 = arith.constant 0 : index
      %c0_29 = arith.constant 0 : index
      %50 = vector.load %arg6[%c0_28, %c0_29] : memref<8x128xf32, #tpu.memory_space<vmem>>, vector<8x128xf32>
      tpu.vector_store %arg6[%c0_28, %c0_29], %49 {strides = array<i32>} : memref<8x128xf32, #tpu.memory_space<vmem>>, vector<8x128xf32>,
    } else {
    }
    %c0 = arith.constant 0 : index
    %c0_1 = arith.constant 0 : index
    %3 = vector.load %arg2[%c0, %c0_1] : memref<8x128xf32, #tpu.memory_space<vmem>>, vector<8x128xf32>
    %c0_2 = arith.constant 0 : index
    %c0_3 = arith.constant 0 : index
    %4 = vector.load %arg3[%c0_2, %c0_3] : memref<8x128xf32, #tpu.memory_space<vmem>>, vector<8x128xf32>
    %5 = arith.subf %3, %4 : vector<8x128xf32>
    %6 = vector.shape_cast %5 : vector<8x128xf32> to vector<1x8x128xf32>
    %c0_4 = arith.constant 0 : index
    %c0_5 = arith.constant 0 : index
    %7 = vector.load %arg5[%c0_4, %c0_5] : memref<8x128xf32, #tpu.memory_space<vmem>>, vector<8x128xf32>
    %8 = arith.mulf %6, %6 : vector<1x8x128xf32>
    %cst = arith.constant dense<0.000000e+00> : vector<8x128xf32>
    %9 = vector.multi_reduction <add>, %8, %cst [0] : vector<1x8x128xf32> to vector<8x128xf32>
    %10 = arith.addf %7, %9 : vector<8x128xf32>
    %c0_6 = arith.constant 0 : index
    %c0_7 = arith.constant 0 : index
    %11 = vector.load %arg5[%c0_6, %c0_7] : memref<8x128xf32, #tpu.memory_space<vmem>>, vector<8x128xf32>
    tpu.vector_store %arg5[%c0_6, %c0_7], %10 {strides = array<i32>} : memref<8x128xf32, #tpu.memory_space<vmem>>, vector<8x128xf32>,
    %c0_8 = arith.constant 0 : index
    %c0_9 = arith.constant 0 : index
    %12 = vector.load %arg4[%c0_8, %c0_9] : memref<8x128xf32, #tpu.memory_space<vmem>>, vector<8x128xf32>
    %13 = tpu.iota {dimensions = array<i32: 1>} : vector<8x128xi32>
    %c1_i32 = arith.constant 1 : i32
    %14 = tpu.dynamic_rotate %12 by %c1_i32 dim 1 : vector<8x128xf32>, i32 -> vector<8x128xf32>
    %c8_i32 = arith.constant 8 : i32
    %c0_i32_10 = arith.constant 0 : i32
    %15 = arith.cmpi eq, %c8_i32, %c0_i32_10 : i32
    %c1_i32_11 = arith.constant 1 : i32
    %16 = arith.select %15, %c1_i32_11, %c8_i32 : i32
    %17 = vector.broadcast %16 : i32 to vector<8x128xi32>
    %18 = arith.remsi %13, %17 : vector<8x128xi32>
    %c0_i32_12 = arith.constant 0 : i32
    %19 = vector.broadcast %c0_i32_12 : i32 to vector<8x128xi32>
    %20 = arith.cmpi ne, %18, %19 : vector<8x128xi32>
    %c0_i32_13 = arith.constant 0 : i32
    %21 = vector.broadcast %c0_i32_13 : i32 to vector<8x128xi32>
    %22 = arith.cmpi slt, %18, %21 : vector<8x128xi32>
    %c0_i32_14 = arith.constant 0 : i32
    %23 = arith.cmpi slt, %16, %c0_i32_14 : i32
    %24 = vector.broadcast %23 : i1 to vector<8x128xi1>
    %25 = vector.broadcast %24 : vector<8x128xi1> to vector<8x128xi1>
    %26 = arith.xori %22, %25 : vector<8x128xi1>
    %27 = arith.andi %26, %20 : vector<8x128xi1>
    %28 = vector.broadcast %16 : i32 to vector<8x128xi32>
    %29 = arith.addi %18, %28 : vector<8x128xi32>
    %30 = arith.select %27, %29, %18 : vector<8x128xi1>, vector<8x128xi32>
    %c0_i32_15 = arith.constant 0 : i32
    %31 = vector.broadcast %c0_i32_15 : i32 to vector<8x128xi32>
    %32 = arith.cmpi eq, %30, %31 : vector<8x128xi32>
    %cst_16 = arith.constant 0.000000e+00 : f32
    %33 = vector.broadcast %cst_16 : f32 to vector<8x128xf32>
    %34 = arith.select %32, %33, %14 : vector<8x128xi1>, vector<8x128xf32>
    %35 = arith.mulf %12, %12 : vector<8x128xf32>
    %cst_17 = arith.constant 1.005000e+01 : f32
    %36 = vector.broadcast %cst_17 : f32 to vector<8x128xf32>
    %37 = arith.mulf %36, %35 : vector<8x128xf32>
    %38 = arith.mulf %12, %34 : vector<8x128xf32>
    %cst_18 = arith.constant 1.000000e+01 : f32
    %39 = vector.broadcast %cst_18 : f32 to vector<8x128xf32>
    %40 = arith.mulf %39, %38 : vector<8x128xf32>
    %41 = arith.subf %37, %40 : vector<8x128xf32>
    %c0_19 = arith.constant 0 : index
    %c0_20 = arith.constant 0 : index
    %42 = vector.load %arg6[%c0_19, %c0_20] : memref<8x128xf32, #tpu.memory_space<vmem>>, vector<8x128xf32>
    %43 = vector.shape_cast %41 : vector<8x128xf32> to vector<1x8x128xf32>
    %cst_21 = arith.constant dense<0.000000e+00> : vector<8x128xf32>
    %44 = vector.multi_reduction <add>, %43, %cst_21 [0] : vector<1x8x128xf32> to vector<8x128xf32>
    %45 = arith.addf %42, %44 : vector<8x128xf32>
    %c0_22 = arith.constant 0 : index
    %c0_23 = arith.constant 0 : index
    %46 = vector.load %arg6[%c0_22, %c0_23] : memref<8x128xf32, #tpu.memory_space<vmem>>, vector<8x128xf32>
    tpu.vector_store %arg6[%c0_22, %c0_23], %45 {strides = array<i32>} : memref<8x128xf32, #tpu.memory_space<vmem>>, vector<8x128xf32>,
    return
  }
  func.func @transform_0(%arg0: i32, %arg1: i32) -> (i32, i32) {
    %c1_i32 = arith.constant 1 : i32
    %0 = arith.muli %arg0, %c1_i32 : i32
    %1 = arith.addi %0, %arg1 : i32
    %c0_i32 = arith.constant 0 : i32
    %c0_i32_0 = arith.constant 0 : i32
    return %1, %c0_i32 : i32, i32
  }
  func.func @transform_1(%arg0: i32, %arg1: i32) -> (i32, i32) {
    %c1_i32 = arith.constant 1 : i32
    %0 = arith.muli %arg0, %c1_i32 : i32
    %1 = arith.addi %0, %arg1 : i32
    %c0_i32 = arith.constant 0 : i32
    %c0_i32_0 = arith.constant 0 : i32
    return %1, %c0_i32 : i32, i32
  }
  func.func @transform_2(%arg0: i32, %arg1: i32) -> (i32, i32) {
    %c1_i32 = arith.constant 1 : i32
    %0 = arith.muli %arg0, %c1_i32 : i32
    %1 = arith.addi %0, %arg1 : i32
    %c0_i32 = arith.constant 0 : i32
    %c0_i32_0 = arith.constant 0 : i32
    return %1, %c0_i32 : i32, i32
  }
  func.func @transform_3(%arg0: i32, %arg1: i32) -> (i32, i32) {
    %c0_i32 = arith.constant 0 : i32
    %c0_i32_0 = arith.constant 0 : i32
    return %arg0, %c0_i32 : i32, i32
  }
  func.func @transform_4(%arg0: i32, %arg1: i32) -> (i32, i32) {
    %c0_i32 = arith.constant 0 : i32
    %c0_i32_0 = arith.constant 0 : i32
    return %arg0, %c0_i32 : i32, i32
  }
}

</mosaic_0001>

<llo_original>
// kernel: tpu_custom_call.1
$region0: #{tpu_custom_call.1}
  #allocation0 [shape = 'u32[]', space=smem, size = 0x4, offset = 0x4, fixed_abs, tag = 'smem constant byte address 0x4 - core index']
  #allocation1 [shape = 'u32[144,128]{1,0:T(1,128)}', space=vmem, size = 0x12000, scoped, tag = 'internal scratch']
  %s0 = inlined_call_operand.hbm [shape: f32[8,128], index: 0, kind: input, shape index: {}]
  %s1 = inlined_call_operand.hbm [shape: f32[8,128], index: 1, kind: input, shape index: {}]
  %s2 = inlined_call_operand.hbm [shape: f32[8,128], index: 2, kind: input, shape index: {}]
  %s3 = inlined_call_operand.hbm [shape: f32[8,128], index: 3, kind: output, shape index: {0}]
  %s4 = inlined_call_operand.hbm [shape: f32[8,128], index: 4, kind: output, shape index: {1}]
  %5 = xla_tuple %s3, %s4
  %s6 = sld [smem:[#allocation0]]
  $region46: #{tpu_custom_call.1} parent=0
    _
  %s8 = ssub.s32 1, %s6
  %s9 = scalar_select 0, %s8, %s6
  $region1: #{tpu_custom_call.1} parent=0
    #allocation2 [shape = 'u8[4096]{0}', space=vmem, size = 0x1000, scoped, tag = 'input window, operand 0, single buffered']
    #allocation3 [shape = 's32[1]{0}', space=sflag, size = 0x4, scoped, tag = 'scoped memory for tpu_custom_call.1']
    #allocation4 [shape = 's32[1]{0}', space=sflag, size = 0x4, scoped, tag = 'scoped memory for tpu_custom_call.1']
    #allocation5 [shape = 'u8[4096]{0}', space=vmem, size = 0x1000, scoped, tag = 'input window, operand 1, single buffered']
    #allocation6 [shape = 's32[1]{0}', space=sflag, size = 0x4, scoped, tag = 'scoped memory for tpu_custom_call.1']
    #allocation7 [shape = 'u8[4096]{0}', space=vmem, size = 0x1000, scoped, tag = 'input window, operand 2, single buffered']
    #allocation8 [shape = 'u8[4096]{0}', space=vmem, size = 0x1000, scoped, tag = 'output window, operand 0, single buffered']
    #allocation9 [shape = 'u8[4096]{0}', space=vmem, size = 0x1000, scoped, tag = 'output window, operand 1, single buffered']
    #allocation10 [shape = 's32[1]{0}', space=sflag, size = 0x4, scoped, tag = 'scoped memory for tpu_custom_call.1']
    %10 = vsyncpa [#allocation3], 0
    %11 = vsyncpa [#allocation6], 0
    %12 = vsyncpa [#allocation4], 0
    %13 = vsyncpa [#allocation10], 0
    // Predicated region
    $region2: #{tpu_custom_call.1} parent=1 // pred_check
      _
    $region3: #{tpu_custom_call.1} parent=1 // pred_check_branch
      %15 = sbr.rel (0) target = $region5
    $region4: #{tpu_custom_call.1} parent=1 // pred_region
      %s16 = sadd.s32 0, 0
      %s18 = ssub.s32 128, 128
      %19 = vsyncadd [#allocation3], %s18
      %s20 = smul.addr %s16, 128
      %s21 = scalar_lea.hbm %s0, %s20
      %s23 = sshll.u32 [#allocation2], 4
      %s24 = int_to_ptr.vmem [resolvable:$true] %s23
      %26 = dma.hbm_to_vmem [thread:$0]  %s21, 128, %s24, [#allocation3]
    $region5: #{tpu_custom_call.1} parent=1 // pred_fallthru
      _
    // Predicated region
    $region6: #{tpu_custom_call.1} parent=1 // pred_check
      _
    $region7: #{tpu_custom_call.1} parent=1 // pred_check_branch
      %28 = sbr.rel (0) target = $region9
    $region8: #{tpu_custom_call.1} parent=1 // pred_region
      %s29 = sadd.s32 0, 0
      %s31 = ssub.s32 128, 128
      %32 = vsyncadd [#allocation6], %s31
      %s33 = smul.addr %s29, 128
      %s34 = scalar_lea.hbm %s1, %s33
      %s36 = sshll.u32 [#allocation5], 4
      %s37 = int_to_ptr.vmem [resolvable:$true] %s36
      %39 = dma.hbm_to_vmem [thread:$0]  %s34, 128, %s37, [#allocation6]
    $region9: #{tpu_custom_call.1} parent=1 // pred_fallthru
      _
    // Predicated region
    $region10: #{tpu_custom_call.1} parent=1 // pred_check
      _
    $region11: #{tpu_custom_call.1} parent=1 // pred_check_branch
      %41 = sbr.rel (0) target = $region13
    $region12: #{tpu_custom_call.1} parent=1 // pred_region
      %s42 = sadd.s32 0, 0
      %s44 = ssub.s32 128, 128
      %45 = vsyncadd [#allocation6], %s44
      %s46 = smul.addr %s42, 128
      %s47 = scalar_lea.hbm %s2, %s46
      %s49 = sshll.u32 [#allocation7], 4
      %s50 = int_to_ptr.vmem [resolvable:$true] %s49
      %52 = dma.hbm_to_vmem [thread:$0]  %s47, 128, %s50, [#allocation6]
    $region13: #{tpu_custom_call.1} parent=1 // pred_fallthru
      _
    // Predicated region
    $region14: #{tpu_custom_call.1} parent=1 // pred_check
      _
    $region15: #{tpu_custom_call.1} parent=1 // pred_check_branch
      %54 = sbr.rel (0) target = $region17
    $region16: #{tpu_custom_call.1} parent=1 // pred_region
      %55 = dma.done [#allocation3], 128
    $region17: #{tpu_custom_call.1} parent=1 // pred_fallthru
      _
    // Predicated region
    $region18: #{tpu_custom_call.1} parent=1 // pred_check
      _
    $region19: #{tpu_custom_call.1} parent=1 // pred_check_branch
      %57 = sbr.rel (0) target = $region21
    $region20: #{tpu_custom_call.1} parent=1 // pred_region
      %58 = dma.done [#allocation6], 128
    $region21: #{tpu_custom_call.1} parent=1 // pred_fallthru
      _
    // Predicated region
    $region22: #{tpu_custom_call.1} parent=1 // pred_check
      _
    $region23: #{tpu_custom_call.1} parent=1 // pred_check_branch
      %60 = sbr.rel (0) target = $region25
    $region24: #{tpu_custom_call.1} parent=1 // pred_region
      %61 = dma.done [#allocation6], 128
    $region25: #{tpu_custom_call.1} parent=1 // pred_fallthru
      _
    %s62 = sadd.s32 0, 0
    %s63 = sadd.s32 0, 0
    %s64 = sadd.s32 0, 0
    %p65 = scmp.eq.s32.totalorder 0, 0
    // Predicated region
    $region26: #{tpu_custom_call.1} parent=1 // pred_check
      %p66 = pneg %p65
    $region27: #{tpu_custom_call.1} parent=1 // pred_check_branch
      %68 = sbr.rel (%p66) target = $region29
    $region28: #{tpu_custom_call.1} parent=1 // pred_region
      %69 = vst [vmem:[#allocation8] sm:$0xff] 0.0
      %70 = vst [vmem:[#allocation9] sm:$0xff] 0.0
    $region29: #{tpu_custom_call.1} parent=1 // pred_fallthru
      _
    %v71 = vld [vmem:[#allocation2] sm:$0xff]
    %v72 = vld [vmem:[#allocation5] sm:$0xff]
    %v73 = vsub.f32 %v71, %v72
    %v74 = vld [vmem:[#allocation8] sm:$0xff]
    %v75 = vmul.f32 %v73, %v73
    %v76 = vadd.f32 %v75, 0.0
    %v77 = vadd.f32 %v74, %v76
    %78 = vst [vmem:[#allocation8] sm:$0xff] %v77
    %v79 = vld [vmem:[#allocation7] sm:$0xff]
    %v80 = vlaneseq
    %v81 = vand.u32 %v80, 127
    %82 = vrot.lane.b32.xlu0 %v79, 1
    %v83 = vpop.permute.xlu0 %82
    %vm84 = vcmp.lt.s32.totalorder %v81, 0
    %v85 = vsub.s32 0, %v81
    %v86 = vsel %vm84, %v85, %v81
    %v87 = vshrl.u32 %v86, 3
    %v88 = vand.u32 %v86, 7
    %v89 = vsub.s32 0, %v88
    %v90 = vsel %vm84, %v89, %v88
    %vm91 = vcmp.ne.s32.totalorder %v90, 0
    %vm92 = vcmp.lt.s32.totalorder %v90, 0
    %vm93 = vmand %vm92, %vm91
    %v94 = vadd.s32 %v90, 8
    %v95 = vsel %vm93, %v94, %v90
    %vm96 = vcmp.eq.s32.totalorder %v95, 0
    %v97 = vsel %vm96, 0.0, %v83
    %v98 = vmul.f32 %v79, %v79
    %v99 = vmul.f32 %v98, 10.05
    %v100 = vmul.f32 %v79, %v97
    %v101 = vmul.f32 %v100, 10.0
    %v102 = vsub.f32 %v99, %v101
    %v103 = vld [vmem:[#allocation9] sm:$0xff]
    %v104 = vadd.f32 %v102, 0.0
    %v105 = vadd.f32 %v103, %v104
    %106 = vst [vmem:[#allocation9] sm:$0xff] %v105
    // Predicated region
    $region30: #{tpu_custom_call.1} parent=1 // pred_check
      _
    $region31: #{tpu_custom_call.1} parent=1 // pred_check_branch
      %108 = sbr.rel (0) target = $region33
    $region32: #{tpu_custom_call.1} parent=1 // pred_region
      %s110 = ssub.s32 128, 128
      %111 = vsyncadd [#allocation4], %s110
      %s113 = sshll.u32 [#allocation8], 4
      %s114 = int_to_ptr.vmem [resolvable:$true] %s113
      %116 = dma.vmem_to_hbm [thread:$0]  %s114, 128, %s3, [#allocation4]
    $region33: #{tpu_custom_call.1} parent=1 // pred_fallthru
      _
    // Predicated region
    $region34: #{tpu_custom_call.1} parent=1 // pred_check
      _
    $region35: #{tpu_custom_call.1} parent=1 // pred_check_branch
      %118 = sbr.rel (0) target = $region37
    $region36: #{tpu_custom_call.1} parent=1 // pred_region
      %s120 = ssub.s32 128, 128
      %121 = vsyncadd [#allocation10], %s120
      %s123 = sshll.u32 [#allocation9], 4
      %s124 = int_to_ptr.vmem [resolvable:$true] %s123
      %126 = dma.vmem_to_hbm [thread:$0]  %s124, 128, %s4, [#allocation10]
    $region37: #{tpu_custom_call.1} parent=1 // pred_fallthru
      _
    // Predicated region
    $region38: #{tpu_custom_call.1} parent=1 // pred_check
      _
    $region39: #{tpu_custom_call.1} parent=1 // pred_check_branch
      %128 = sbr.rel (0) target = $region41
    $region40: #{tpu_custom_call.1} parent=1 // pred_region
      %129 = dma.done [#allocation4], 128
    $region41: #{tpu_custom_call.1} parent=1 // pred_fallthru
      _
    // Predicated region
    $region42: #{tpu_custom_call.1} parent=1 // pred_check
      _
    $region43: #{tpu_custom_call.1} parent=1 // pred_check_branch
      %131 = sbr.rel (0) target = $region45
    $region44: #{tpu_custom_call.1} parent=1 // pred_region
      %132 = dma.done [#allocation10], 128
    $region45: #{tpu_custom_call.1} parent=1 // pred_fallthru
      _
    %133 = vsyncpa [#allocation3], 1
    %134 = vsyncpa [#allocation6], 1
    %135 = vsyncpa [#allocation4], 1
    %136 = vsyncpa [#allocation10], 1

</llo_original>
